<compile_context>
chip_gen: v6e
topology: v6e:2x2x1
jax: 0.10.0
libtpu: 0.0.40
codegen_flags: <defaults>
</compile_context>

<pallas_src>
import functools

import jax
import jax.numpy as jnp
import numpy as np
from jax import lax
from jax.experimental import pallas as pl
from jax.experimental.pallas import tpu as pltpu


def _mix_u32(x):
    """splitmix32-style avalanche finalizer (pure 32-bit VPU integer ops)."""
    x = (x ^ (x >> 16)) * jnp.uint32(0x7FEB352D)
    x = (x ^ (x >> 15)) * jnp.uint32(0x846CA68B)
    x = x ^ (x >> 16)
    return x


def _fusing_kernel(dropout_p, tile_b, hidden,
                   seed_ref, fq_ref, f0_ref, f1_ref, f2_ref,
                   gate_ref, omg_ref, out_ref):
    gate = gate_ref[...]            # (1, H) -> broadcasts over rows
    one_minus_gate = omg_ref[...]   # (1, H), precomputed in the wrapper
    bank = f0_ref[...] + f1_ref[...] + f2_ref[...]          # VPU adds
    y = fq_ref[...] * gate + bank * one_minus_gate          # gated fusion

    if dropout_p > 0.0:
        shape = y.shape                                      # (tile_b, hidden)
        row_off = pl.program_id(0) * tile_b                  # global row base
        row = lax.broadcasted_iota(jnp.int32, shape, 0) + row_off
        col = lax.broadcasted_iota(jnp.int32, shape, 1)
        seed = seed_ref[0]                                   # int32 (SMEM)
        # Unique per-element counter, mixed with the seed, then hashed.
        z = row * hidden + col + seed * jnp.int32(1000003)
        bits = _mix_u32(z.astype(jnp.uint32))
        # 31-bit value -> signed compare against an integer threshold.
        bits31 = (bits & jnp.uint32(0x7FFFFFFF)).astype(jnp.int32)
        threshold = jnp.int32(int(dropout_p * 2147483648.0))  # p * 2^31
        keep = bits31 >= threshold
        scale = jnp.asarray(1.0 / (1.0 - dropout_p), dtype=y.dtype)
        y = jnp.where(keep, y * scale, jnp.zeros_like(y))

    out_ref[...] = y


def fusing_layer(feat_q, facts, gate, *, dropout_p=0.0, seed=0):
    """feat_q: (B, H); facts: list of 3 arrays (B, H); gate: (H,)."""
    B, H = feat_q.shape
    dtype = feat_q.dtype
    gate2d = gate.reshape(1, H).astype(dtype)
    omg2d = (jnp.float32(1.0) - gate2d.astype(jnp.float32)).astype(dtype)
    seed_arr = jnp.array([seed], dtype=jnp.int32)

    # Size TILE_B so 2 (double-buffer) x 5 streamed (TILE_B, H) arrays stay
    # within a conservative VMEM budget that is safe on v5e/v6e/v7x alike.
    itemsize = jnp.dtype(dtype).itemsize
    budget_bytes = 24 * 1024 * 1024
    per_row_bytes = 2 * 5 * H * itemsize
    tile_b = max(8, min(512, budget_bytes // per_row_bytes))
    tile_b = (tile_b // 8) * 8            # sublane-aligned
    if tile_b >= B:
        tile_b = B                        # full-dim block always legal
    grid = (pl.cdiv(B, tile_b),)

    kernel = functools.partial(_fusing_kernel, float(dropout_p), tile_b, H)

    def tile_map(i, seed):                # (grid idx, scalar-prefetch ref)
        return (i, 0)

    def gate_map(i, seed):
        return (0, 0)

    return pl.pallas_call(
        kernel,
        out_shape=jax.ShapeDtypeStruct((B, H), dtype),
        grid_spec=pltpu.PrefetchScalarGridSpec(
            num_scalar_prefetch=1,        # seed lands in SMEM
            grid=grid,
            in_specs=[
                pl.BlockSpec((tile_b, H), tile_map),   # feat_q
                pl.BlockSpec((tile_b, H), tile_map),   # facts[0]
                pl.BlockSpec((tile_b, H), tile_map),   # facts[1]
                pl.BlockSpec((tile_b, H), tile_map),   # facts[2]
                pl.BlockSpec((1, H), gate_map),        # gate
                pl.BlockSpec((1, H), gate_map),        # 1 - gate
            ],
            out_specs=pl.BlockSpec((tile_b, H), tile_map),
        ),
        compiler_params=pltpu.CompilerParams(
            dimension_semantics=("parallel",),         # megacore-shard batch
            vmem_limit_bytes=32 * 1024 * 1024,
        ),
    )(seed_arr, feat_q, facts[0], facts[1], facts[2], gate2d, omg2d)


if __name__ == "__main__":
    B, H = 8, 128                      # small (batch, hidden_size)
    DROPOUT = 0.2

    key = jax.random.PRNGKey(0)
    k_q, k0, k1, k2 = jax.random.split(key, 4)
    feat_q = jax.random.normal(k_q, (B, H), dtype=jnp.float32)
    facts = [
        jax.random.normal(k0, (B, H), dtype=jnp.float32),
        jax.random.normal(k1, (B, H), dtype=jnp.float32),
        jax.random.normal(k2, (B, H), dtype=jnp.float32),
    ]
    # gate initialized deterministically to 0.5, as in the module's __init__
    gate = jnp.full((H,), 0.5, dtype=jnp.float32)

    bank = facts[0] + facts[1] + facts[2]
    ref = feat_q * gate[None, :] + bank * (1.0 - gate[None, :])

    # 1) Correctness with dropout disabled (deterministic path).
    out_nodrop = jax.block_until_ready(
        fusing_layer(feat_q, facts, gate, dropout_p=0.0))
    np.testing.assert_allclose(np.asarray(out_nodrop), np.asarray(ref),
                               rtol=1e-6, atol=1e-6)

    # 2) Dropout active (training-mode nn.Dropout semantics):
    #    each element is either 0 or ref / (1 - p).
    out_drop = jax.block_until_ready(
        fusing_layer(feat_q, facts, gate, dropout_p=DROPOUT, seed=1234))
    assert out_drop.shape == (B, H)
    out_np, ref_np = np.asarray(out_drop), np.asarray(ref)
    dropped = out_np == 0.0
    zero_frac = float(np.mean(dropped))
    assert 0.05 < zero_frac < 0.45, zero_frac      # ~p with wide slack
    np.testing.assert_allclose(out_np[~dropped],
                               ref_np[~dropped] / (1.0 - DROPOUT),
                               rtol=1e-5, atol=1e-5)

    print("KERNEL_OK")
</pallas_src>

<mosaic_0001>
module attributes {stable_mosaic.version = 11 : i64} {
  func.func @_fusing_kernel(%arg0: i32, %arg1: memref<1xi32, #tpu.memory_space<smem>>, %arg2: memref<8x128xf32, #tpu.memory_space<vmem>>, %arg3: memref<8x128xf32, #tpu.memory_space<vmem>>, %arg4: memref<8x128xf32, #tpu.memory_space<vmem>>, %arg5: memref<8x128xf32, #tpu.memory_space<vmem>>, %arg6: memref<1x128xf32, #tpu.memory_space<vmem>>, %arg7: memref<1x128xf32, #tpu.memory_space<vmem>>, %arg8: memref<8x128xf32, #tpu.memory_space<vmem>>) attributes {dimension_semantics = [#tpu.dimension_semantics<parallel>], iteration_bounds = array<i64: 1>, scalar_prefetch = 1 : i64, scratch_operands = 0 : i64, tpu.core_type = #tpu.core_type<tc>, window_params = [{transform_indices = @transform_0, window_bounds = array<i64: 8, 128>}, {transform_indices = @transform_1, window_bounds = array<i64: 8, 128>}, {transform_indices = @transform_2, window_bounds = array<i64: 8, 128>}, {transform_indices = @transform_3, window_bounds = array<i64: 8, 128>}, {pipeline_mode = #tpu.pipeline_mode<synchronous>, transform_indices = @transform_4, window_bounds = array<i64: 1, 128>}, {pipeline_mode = #tpu.pipeline_mode<synchronous>, transform_indices = @transform_5, window_bounds = array<i64: 1, 128>}, {transform_indices = @transform_6, window_bounds = array<i64: 8, 128>}]} {
    %c0 = arith.constant 0 : index
    %c0_0 = arith.constant 0 : index
    %0 = vector.load %arg6[%c0, %c0_0] : memref<1x128xf32, #tpu.memory_space<vmem>>, vector<1x128xf32>
    %c0_1 = arith.constant 0 : index
    %c0_2 = arith.constant 0 : index
    %1 = vector.load %arg7[%c0_1, %c0_2] : memref<1x128xf32, #tpu.memory_space<vmem>>, vector<1x128xf32>
    %c0_3 = arith.constant 0 : index
    %c0_4 = arith.constant 0 : index
    %2 = vector.load %arg3[%c0_3, %c0_4] : memref<8x128xf32, #tpu.memory_space<vmem>>, vector<8x128xf32>
    %c0_5 = arith.constant 0 : index
    %c0_6 = arith.constant 0 : index
    %3 = vector.load %arg4[%c0_5, %c0_6] : memref<8x128xf32, #tpu.memory_space<vmem>>, vector<8x128xf32>
    %4 = arith.addf %2, %3 : vector<8x128xf32>
    %c0_7 = arith.constant 0 : index
    %c0_8 = arith.constant 0 : index
    %5 = vector.load %arg5[%c0_7, %c0_8] : memref<8x128xf32, #tpu.memory_space<vmem>>, vector<8x128xf32>
    %6 = arith.addf %4, %5 : vector<8x128xf32>
    %c0_9 = arith.constant 0 : index
    %c0_10 = arith.constant 0 : index
    %7 = vector.load %arg2[%c0_9, %c0_10] : memref<8x128xf32, #tpu.memory_space<vmem>>, vector<8x128xf32>
    %8 = vector.broadcast %0 : vector<1x128xf32> to vector<8x128xf32>
    %9 = arith.mulf %7, %8 : vector<8x128xf32>
    %10 = vector.broadcast %1 : vector<1x128xf32> to vector<8x128xf32>
    %11 = arith.mulf %6, %10 : vector<8x128xf32>
    %12 = arith.addf %9, %11 : vector<8x128xf32>
    %c0_11 = arith.constant 0 : index
    %c0_12 = arith.constant 0 : index
    %13 = vector.load %arg8[%c0_11, %c0_12] : memref<8x128xf32, #tpu.memory_space<vmem>>, vector<8x128xf32>
    tpu.vector_store %arg8[%c0_11, %c0_12], %12 {strides = array<i32>} : memref<8x128xf32, #tpu.memory_space<vmem>>, vector<8x128xf32>,
    return
  }
  func.func @transform_0(%arg0: i32, %arg1: memref<1xi32, #tpu.memory_space<smem>>) -> (i32, i32) {
    %c0_i32 = arith.constant 0 : i32
    %c0_i32_0 = arith.constant 0 : i32
    return %arg0, %c0_i32 : i32, i32
  }
  func.func @transform_1(%arg0: i32, %arg1: memref<1xi32, #tpu.memory_space<smem>>) -> (i32, i32) {
    %c0_i32 = arith.constant 0 : i32
    %c0_i32_0 = arith.constant 0 : i32
    return %arg0, %c0_i32 : i32, i32
  }
  func.func @transform_2(%arg0: i32, %arg1: memref<1xi32, #tpu.memory_space<smem>>) -> (i32, i32) {
    %c0_i32 = arith.constant 0 : i32
    %c0_i32_0 = arith.constant 0 : i32
    return %arg0, %c0_i32 : i32, i32
  }
  func.func @transform_3(%arg0: i32, %arg1: memref<1xi32, #tpu.memory_space<smem>>) -> (i32, i32) {
    %c0_i32 = arith.constant 0 : i32
    %c0_i32_0 = arith.constant 0 : i32
    return %arg0, %c0_i32 : i32, i32
  }
  func.func @transform_4(%arg0: i32, %arg1: memref<1xi32, #tpu.memory_space<smem>>) -> (i32, i32) {
    %c0_i32 = arith.constant 0 : i32
    %c0_i32_0 = arith.constant 0 : i32
    %c0_i32_1 = arith.constant 0 : i32
    return %c0_i32, %c0_i32_0 : i32, i32
  }
  func.func @transform_5(%arg0: i32, %arg1: memref<1xi32, #tpu.memory_space<smem>>) -> (i32, i32) {
    %c0_i32 = arith.constant 0 : i32
    %c0_i32_0 = arith.constant 0 : i32
    %c0_i32_1 = arith.constant 0 : i32
    return %c0_i32, %c0_i32_0 : i32, i32
  }
  func.func @transform_6(%arg0: i32, %arg1: memref<1xi32, #tpu.memory_space<smem>>) -> (i32, i32) {
    %c0_i32 = arith.constant 0 : i32
    %c0_i32_0 = arith.constant 0 : i32
    return %arg0, %c0_i32 : i32, i32
  }
}

</mosaic_0001>

<llo_original>
// kernel: tpu_custom_call.1
$region0: #{tpu_custom_call.1}
  #allocation0 [shape = 'u32[]', space=smem, size = 0x4, offset = 0x4, fixed_abs, tag = 'smem constant byte address 0x4 - core index']
  #allocation1 [shape = 'u32[144,128]{1,0:T(1,128)}', space=vmem, size = 0x12000, scoped, tag = 'internal scratch']
  #allocation2 [shape = 's32[1]{0}', space=sflag, size = 0x4, scoped, tag = 'scoped memory for tpu_custom_call.1']
  #allocation3 [shape = 's32[1]{0:T(128)S(6)}', space=smem, size = 0x200, scoped, tag = 'prefetched SMEM operand 0']
  %s0 = inlined_call_operand.<no memory space> [shape: s32[1], index: 0, kind: input, shape index: {}]
  %s1 = inlined_call_operand.hbm [shape: f32[8,128], index: 1, kind: input, shape index: {}]
  %s2 = inlined_call_operand.hbm [shape: f32[8,128], index: 2, kind: input, shape index: {}]
  %s3 = inlined_call_operand.hbm [shape: f32[8,128], index: 3, kind: input, shape index: {}]
  %s4 = inlined_call_operand.hbm [shape: f32[8,128], index: 4, kind: input, shape index: {}]
  %s5 = inlined_call_operand.vmem [shape: f32[1,128], index: 5, kind: input, shape index: {}]
  %s6 = inlined_call_operand.vmem [shape: f32[1,128], index: 6, kind: input, shape index: {}]
  %s7 = inlined_call_operand.hbm [shape: f32[8,128], index: 7, kind: output, shape index: {}]
  %s8 = sld [smem:[#allocation0]]
  $region50: #{tpu_custom_call.1} parent=0
    _
  %s10 = ssub.s32 1, %s8
  %s11 = scalar_select 0, %s10, %s8
  %12 = sst [smem:[#allocation3]] %s0
  $region1: #{tpu_custom_call.1} parent=0
    #allocation4 [shape = 'u8[4096]{0}', space=vmem, size = 0x1000, scoped, tag = 'input window, operand 1, single buffered']
    #allocation5 [shape = 's32[1]{0}', space=sflag, size = 0x4, scoped, tag = 'scoped memory for tpu_custom_call.1']
    #allocation6 [shape = 's32[1]{0}', space=sflag, size = 0x4, scoped, tag = 'scoped memory for tpu_custom_call.1']
    #allocation7 [shape = 'u8[4096]{0}', space=vmem, size = 0x1000, scoped, tag = 'input window, operand 2, single buffered']
    #allocation8 [shape = 's32[1]{0}', space=sflag, size = 0x4, scoped, tag = 'scoped memory for tpu_custom_call.1']
    #allocation9 [shape = 'u8[4096]{0}', space=vmem, size = 0x1000, scoped, tag = 'input window, operand 3, single buffered']
    #allocation10 [shape = 'u8[4096]{0}', space=vmem, size = 0x1000, scoped, tag = 'input window, operand 4, single buffered']
    #allocation11 [shape = 's32[1]{0}', space=sflag, size = 0x4, scoped, tag = 'scoped memory for tpu_custom_call.1']
    #allocation12 [shape = 'u8[4096]{0}', space=vmem, size = 0x1000, scoped, tag = 'output window, operand 0, single buffered']
    %13 = vsyncpa [#allocation5], 0
    %14 = vsyncpa [#allocation8], 0
    %15 = vsyncpa [#allocation11], 0
    %16 = vsyncpa [#allocation6], 0
    // Predicated region
    $region2: #{tpu_custom_call.1} parent=1 // pred_check
      _
    $region3: #{tpu_custom_call.1} parent=1 // pred_check_branch
      %18 = sbr.rel (0) target = $region5
    $region4: #{tpu_custom_call.1} parent=1 // pred_region
      %s20 = ssub.s32 128, 128
      %21 = vsyncadd [#allocation5], %s20
      %s23 = sshll.u32 [#allocation4], 4
      %s24 = int_to_ptr.vmem [resolvable:$true] %s23
      %26 = dma.hbm_to_vmem [thread:$0]  %s1, 128, %s24, [#allocation5]
    $region5: #{tpu_custom_call.1} parent=1 // pred_fallthru
      _
    // Predicated region
    $region6: #{tpu_custom_call.1} parent=1 // pred_check
      _
    $region7: #{tpu_custom_call.1} parent=1 // pred_check_branch
      %28 = sbr.rel (0) target = $region9
    $region8: #{tpu_custom_call.1} parent=1 // pred_region
      %s30 = ssub.s32 128, 128
      %31 = vsyncadd [#allocation8], %s30
      %s33 = sshll.u32 [#allocation7], 4
      %s34 = int_to_ptr.vmem [resolvable:$true] %s33
      %36 = dma.hbm_to_vmem [thread:$0]  %s2, 128, %s34, [#allocation8]
    $region9: #{tpu_custom_call.1} parent=1 // pred_fallthru
      _
    // Predicated region
    $region10: #{tpu_custom_call.1} parent=1 // pred_check
      _
    $region11: #{tpu_custom_call.1} parent=1 // pred_check_branch
      %38 = sbr.rel (0) target = $region13
    $region12: #{tpu_custom_call.1} parent=1 // pred_region
      %s40 = ssub.s32 128, 128
      %41 = vsyncadd [#allocation8], %s40
      %s43 = sshll.u32 [#allocation9], 4
      %s44 = int_to_ptr.vmem [resolvable:$true] %s43
      %46 = dma.hbm_to_vmem [thread:$0]  %s3, 128, %s44, [#allocation8]
    $region13: #{tpu_custom_call.1} parent=1 // pred_fallthru
      _
    // Predicated region
    $region14: #{tpu_custom_call.1} parent=1 // pred_check
      _
    $region15: #{tpu_custom_call.1} parent=1 // pred_check_branch
      %48 = sbr.rel (0) target = $region17
    $region16: #{tpu_custom_call.1} parent=1 // pred_region
      %s50 = ssub.s32 128, 128
      %51 = vsyncadd [#allocation11], %s50
      %s53 = sshll.u32 [#allocation10], 4
      %s54 = int_to_ptr.vmem [resolvable:$true] %s53
      %56 = dma.hbm_to_vmem [thread:$0]  %s4, 128, %s54, [#allocation11]
    $region17: #{tpu_custom_call.1} parent=1 // pred_fallthru
      _
    // Predicated region
    $region18: #{tpu_custom_call.1} parent=1 // pred_check
      _
    $region19: #{tpu_custom_call.1} parent=1 // pred_check_branch
      %58 = sbr.rel (0) target = $region21
    $region20: #{tpu_custom_call.1} parent=1 // pred_region
      _
    $region21: #{tpu_custom_call.1} parent=1 // pred_fallthru
      _
    // Predicated region
    $region22: #{tpu_custom_call.1} parent=1 // pred_check
      _
    $region23: #{tpu_custom_call.1} parent=1 // pred_check_branch
      %60 = sbr.rel (0) target = $region25
    $region24: #{tpu_custom_call.1} parent=1 // pred_region
      _
    $region25: #{tpu_custom_call.1} parent=1 // pred_fallthru
      _
    // Predicated region
    $region26: #{tpu_custom_call.1} parent=1 // pred_check
      _
    $region27: #{tpu_custom_call.1} parent=1 // pred_check_branch
      %62 = sbr.rel (0) target = $region29
    $region28: #{tpu_custom_call.1} parent=1 // pred_region
      %63 = dma.done [#allocation5], 128
    $region29: #{tpu_custom_call.1} parent=1 // pred_fallthru
      _
    // Predicated region
    $region30: #{tpu_custom_call.1} parent=1 // pred_check
      _
    $region31: #{tpu_custom_call.1} parent=1 // pred_check_branch
      %65 = sbr.rel (0) target = $region33
    $region32: #{tpu_custom_call.1} parent=1 // pred_region
      %66 = dma.done [#allocation8], 128
    $region33: #{tpu_custom_call.1} parent=1 // pred_fallthru
      _
    // Predicated region
    $region34: #{tpu_custom_call.1} parent=1 // pred_check
      _
    $region35: #{tpu_custom_call.1} parent=1 // pred_check_branch
      %68 = sbr.rel (0) target = $region37
    $region36: #{tpu_custom_call.1} parent=1 // pred_region
      %69 = dma.done [#allocation8], 128
    $region37: #{tpu_custom_call.1} parent=1 // pred_fallthru
      _
    // Predicated region
    $region38: #{tpu_custom_call.1} parent=1 // pred_check
      _
    $region39: #{tpu_custom_call.1} parent=1 // pred_check_branch
      %71 = sbr.rel (0) target = $region41
    $region40: #{tpu_custom_call.1} parent=1 // pred_region
      %72 = dma.done [#allocation11], 128
    $region41: #{tpu_custom_call.1} parent=1 // pred_fallthru
      _
    %v73 = vld [vmem:[%s5] sm:$0x1]
    %v74 = vld [vmem:[%s6] sm:$0x1]
    %v75 = vld [vmem:[#allocation7] sm:$0xff]
    %v76 = vld [vmem:[#allocation9] sm:$0xff]
    %v77 = vadd.f32 %v75, %v76
    %v78 = vld [vmem:[#allocation10] sm:$0xff]
    %v79 = vadd.f32 %v77, %v78
    %v80 = vld [vmem:[#allocation4] sm:$0xff]
    %v82 = vlaneseq
    %v83 = vshrl.u32 %v82, 7
    %v84 = vsub.s32 0, %v83
    %v85 = vrot.slane %v73, %v84
    %v87 = vmul.f32 %v80, %v85
    %v89 = vlaneseq
    %v90 = vshrl.u32 %v89, 7
    %v91 = vsub.s32 0, %v90
    %v92 = vrot.slane %v74, %v91
    %v94 = vmul.f32 %v79, %v92
    %v95 = vadd.f32 %v87, %v94
    %96 = vst [vmem:[#allocation12] sm:$0xff] %v95
    // Predicated region
    $region42: #{tpu_custom_call.1} parent=1 // pred_check
      _
    $region43: #{tpu_custom_call.1} parent=1 // pred_check_branch
      %98 = sbr.rel (0) target = $region45
    $region44: #{tpu_custom_call.1} parent=1 // pred_region
      %s100 = ssub.s32 128, 128
      %101 = vsyncadd [#allocation6], %s100
      %s103 = sshll.u32 [#allocation12], 4
      %s104 = int_to_ptr.vmem [resolvable:$true] %s103
      %106 = dma.vmem_to_hbm [thread:$0]  %s104, 128, %s7, [#allocation6]
    $region45: #{tpu_custom_call.1} parent=1 // pred_fallthru
      _
    // Predicated region
    $region46: #{tpu_custom_call.1} parent=1 // pred_check
      _
    $region47: #{tpu_custom_call.1} parent=1 // pred_check_branch
      %108 = sbr.rel (0) target = $region49
    $region48: #{tpu_custom_call.1} parent=1 // pred_region
      %109 = dma.done [#allocation6], 128
    $region49: #{tpu_custom_call.1} parent=1 // pred_fallthru
      _
    %110 = vsyncpa [#allocation5], 1
    %111 = vsyncpa [#allocation8], 1
    %112 = vsyncpa [#allocation11], 1
    %113 = vsyncpa [#allocation6], 1

</llo_original>
